<compile_context>
chip_gen: v7x
topology: tpu7x:2x2x1
jax: 0.10.0
libtpu: 0.0.40
codegen_flags: <defaults>
</compile_context>

<pallas_src>
import jax
import jax.numpy as jnp
from jax.experimental import pallas as pl
from jax.experimental.pallas import tpu as pltpu


def _pos_add_kernel(x_ref, pos_ref, o_ref):
    # x_ref:   (tb, tl) slab of flattened activations
    # pos_ref: (1, tl)  slab of the flattened positional table (sublane-broadcast)
    o_ref[...] = (x_ref[...] + pos_ref[...]).astype(o_ref.dtype)


def _round_up(x: int, m: int) -> int:
    return ((x + m - 1) // m) * m


def _vmem_capacity_bytes() -> int:
    try:
        return int(pltpu.get_tpu_info().vmem_capacity_bytes)
    except Exception:
        return 64 * 1024 * 1024  # conservative (v7x per-TC)


def positional_embeddings(x: jax.Array, pos: jax.Array,
                          *, target_tile_bytes: int = 6 * 1024 * 1024,
                          min_pallas_bytes: int = 1 * 1024 * 1024) -> jax.Array:
    """x: (B, N, D), pos: (N, D) -> (B, N, D). Equivalent to x + pos[None]."""
    B, N, D = x.shape
    assert pos.shape == (N, D), (pos.shape, (N, D))
    out_dtype = jnp.result_type(x.dtype, pos.dtype)  # matches torch promotion (x + param)
    itemsize = jnp.dtype(out_dtype).itemsize
    L = N * D

    # ---- fast path: tiny inputs are better served by fused XLA elementwise ----
    if B * L * itemsize < min_pallas_bytes:
        return (x + pos[None, :, :]).astype(out_dtype)

    # ---- layout plumbing in the wrapper (lane-dense last dim) ------------------
    x2 = x.reshape(B, L)
    pos2 = pos.reshape(1, L)

    # ---- tile selection ---------------------------------------------------------
    # Lane tile: full row if it fits comfortably, else a big multiple of 128
    # (Pallas masks the ragged last block, which is correct for elementwise add).
    LANE_CAP = 32768                        # 32768 lanes * 4 B = 128 KiB per f32 row
    tl = L if L <= LANE_CAP else LANE_CAP   # LANE_CAP % 128 == 0

    # Sublane multiple is dtype-aware: packed dtypes want 16 (bf16) / 32 (8-bit).
    sub = 8 * max(1, 4 // itemsize)

    # Row (batch) tile: aim for ~target_tile_bytes per x/out tile so each grid
    # step streams MiB-scale data and per-step overhead is amortized.
    rows = max(1, target_tile_bytes // max(1, tl * itemsize))
    if rows >= B:
        tb = B                                     # full batch dim in one block
    else:
        tb = min(B, max(sub, (rows // sub) * sub))  # keep sublane dim packed-aligned

    # ---- guarantee >=2 parallel blocks (v7x has 2 TensorCores per chip) --------
    grid_i = pl.cdiv(B, tb)   # batch blocks
    grid_j = pl.cdiv(L, tl)   # lane blocks
    if grid_i * grid_j == 1:
        if L >= 256:
            tl = _round_up(pl.cdiv(L, 2), 128)
        elif B >= 2:
            tb = pl.cdiv(B, 2)
        grid_i = pl.cdiv(B, tb)
        grid_j = pl.cdiv(L, tl)

    # ---- VMEM budget ------------------------------------------------------------
    # x + out tiles, double-buffered, plus the (1, tl) pos slab which pads to the
    # full 8-sublane (32-byte-per-lane) tile: 32 * tl bytes per buffer, x2 buffers.
    need = 4 * tb * tl * itemsize + 2 * 32 * tl
    cap = min(int(0.75 * _vmem_capacity_bytes()), 96 * 1024 * 1024)
    vmem_limit = int(min(cap, max(16 * 1024 * 1024, int(1.5 * need))))

    cost = pl.CostEstimate(
        flops=B * L,                                        # one add per element
        transcendentals=0,
        bytes_accessed=(B * L) * (x.dtype.itemsize + itemsize) + L * pos.dtype.itemsize,
    )

    # Lane axis j is the OUTER grid dim so pos's block index (0, j) is constant
    # across the inner batch sweep -> Pallas skips refetching the pos slab.
    out2 = pl.pallas_call(
        _pos_add_kernel,
        out_shape=jax.ShapeDtypeStruct((B, L), out_dtype),
        grid_spec=pltpu.PrefetchScalarGridSpec(
            num_scalar_prefetch=0,
            grid=(grid_j, grid_i),
            in_specs=[
                pl.BlockSpec((tb, tl), lambda j, i: (i, j)),   # activations
                pl.BlockSpec((1, tl), lambda j, i: (0, j)),    # pos table (invariant over i)
            ],
            out_specs=pl.BlockSpec((tb, tl), lambda j, i: (i, j)),
        ),
        compiler_params=pltpu.CompilerParams(
            dimension_semantics=("parallel", "parallel"),
            vmem_limit_bytes=vmem_limit,
        ),
        cost_estimate=cost,
    )(x2, pos2)

    return out2.reshape(B, N, D)
    # TODO(synk): for production, fuse this broadcast add into the adjacent kernel
    # that already holds x in VMEM (saves a full HBM read+write of x).


if __name__ == "__main__":
    key = jax.random.PRNGKey(0)
    kx, kp, kx2, kp2, kx3, kp3 = jax.random.split(key, 6)

    # --- Test 1: module-scale tiny input (takes the fused-XLA fast path) -------
    B, N, D = 2, 8, 32
    x = jax.random.normal(kx, (B, N, D), dtype=jnp.float32)
    pos = jax.random.normal(kp, (N, D), dtype=jnp.float32)   # stand-in for nn.Parameter
    y = positional_embeddings(x, pos)
    jax.block_until_ready(y)
    ref = x + pos[None, :, :]
    assert y.shape == (B, N, D) and y.dtype == ref.dtype
    assert jnp.allclose(y, ref, atol=1e-6, rtol=1e-6)

    # --- Test 2: force the Pallas path (f32), exercises the >=2-block split ----
    B2, N2, D2 = 4, 64, 128
    x2 = jax.random.normal(kx2, (B2, N2, D2), dtype=jnp.float32)
    pos2 = jax.random.normal(kp2, (N2, D2), dtype=jnp.float32)
    y2 = positional_embeddings(x2, pos2, min_pallas_bytes=0)
    jax.block_until_ready(y2)
    ref2 = x2 + pos2[None, :, :]
    assert y2.shape == (B2, N2, D2) and y2.dtype == ref2.dtype
    assert jnp.allclose(y2, ref2, atol=1e-6, rtol=1e-6)

    # --- Test 3: force the Pallas path (bf16), exercises packed-sublane tiles --
    B3, N3, D3 = 32, 64, 64
    x3 = jax.random.normal(kx3, (B3, N3, D3), dtype=jnp.bfloat16)
    pos3 = jax.random.normal(kp3, (N3, D3), dtype=jnp.bfloat16)
    y3 = positional_embeddings(x3, pos3, min_pallas_bytes=0)
    jax.block_until_ready(y3)
    ref3 = x3 + pos3[None, :, :]
    assert y3.shape == (B3, N3, D3) and y3.dtype == ref3.dtype
    assert jnp.allclose(y3.astype(jnp.float32), ref3.astype(jnp.float32),
                        atol=1e-2, rtol=1e-2)

    print("KERNEL_OK")
</pallas_src>

<mosaic_0001>
module attributes {stable_mosaic.version = 11 : i64} {
  func.func @_pos_add_kernel(%arg0: i32, %arg1: i32, %arg2: memref<4x4096xf32, #tpu.memory_space<vmem>>, %arg3: memref<1x4096xf32, #tpu.memory_space<vmem>>, %arg4: memref<4x4096xf32, #tpu.memory_space<vmem>>) attributes {dimension_semantics = [#tpu.dimension_semantics<parallel>, #tpu.dimension_semantics<parallel>], iteration_bounds = array<i64: 2, 1>, scalar_prefetch = 0 : i64, scratch_operands = 0 : i64, tpu.core_type = #tpu.core_type<tc>, window_params = [{transform_indices = @transform_0, window_bounds = array<i64: 4, 4096>}, {transform_indices = @transform_1, window_bounds = array<i64: 1, 4096>}, {transform_indices = @transform_2, window_bounds = array<i64: 4, 4096>}]} {
    %c0 = arith.constant 0 : index
    %c0_0 = arith.constant 0 : index
    %0 = vector.load %arg2[%c0, %c0_0] : memref<4x4096xf32, #tpu.memory_space<vmem>>, vector<4x4096xf32>
    %c0_1 = arith.constant 0 : index
    %c0_2 = arith.constant 0 : index
    %1 = vector.load %arg3[%c0_1, %c0_2] : memref<1x4096xf32, #tpu.memory_space<vmem>>, vector<1x4096xf32>
    %2 = vector.broadcast %1 : vector<1x4096xf32> to vector<4x4096xf32>
    %3 = arith.addf %0, %2 : vector<4x4096xf32>
    %c0_3 = arith.constant 0 : index
    %c0_4 = arith.constant 0 : index
    %4 = vector.load %arg4[%c0_3, %c0_4] : memref<4x4096xf32, #tpu.memory_space<vmem>>, vector<4x4096xf32>
    tpu.vector_store %arg4[%c0_3, %c0_4], %3 {strides = array<i32>} : memref<4x4096xf32, #tpu.memory_space<vmem>>, vector<4x4096xf32>,
    return
  }
  func.func @transform_0(%arg0: i32, %arg1: i32) -> (i32, i32) {
    %c0_i32 = arith.constant 0 : i32
    return %arg1, %arg0 : i32, i32
  }
  func.func @transform_1(%arg0: i32, %arg1: i32) -> (i32, i32) {
    %c0_i32 = arith.constant 0 : i32
    %c0_i32_0 = arith.constant 0 : i32
    return %c0_i32, %arg0 : i32, i32
  }
  func.func @transform_2(%arg0: i32, %arg1: i32) -> (i32, i32) {
    %c0_i32 = arith.constant 0 : i32
    return %arg1, %arg0 : i32, i32
  }
}

</mosaic_0001>

<llo_original>
// kernel: tpu_custom_call.1
$region0: #{tpu_custom_call.1}
  #allocation0 [shape = 'u32[]', space=smem, size = 0x4, offset = 0x4, fixed_abs, tag = 'smem constant byte address 0x4 - core index']
  #allocation1 [shape = 'u32[144,128]{1,0:T(1,128)}', space=vmem, size = 0x12000, scoped, tag = 'internal scratch']
  %s0 = inlined_call_operand.hbm [shape: f32[4,8192], index: 0, kind: input, shape index: {}]
  %s1 = inlined_call_operand.hbm [shape: f32[1,8192], index: 1, kind: input, shape index: {}]
  %s2 = inlined_call_operand.hbm [shape: f32[4,8192], index: 2, kind: output, shape index: {}]
  %s3 = sld [smem:[#allocation0]]
  $region49: #{tpu_custom_call.1} parent=0
    _
  %s5 = ssub.s32 1, %s3
  %s6 = scalar_select 0, %s5, %s3
  $region1: #{tpu_custom_call.1} parent=0
    #allocation2 [shape = 'u8[131072]{0}', space=vmem, size = 0x20000, scoped, tag = 'input window, operand 0']
    #allocation3 [shape = 's32[2]{0}', space=sflag, size = 0x8, scoped, tag = 'scoped memory for tpu_custom_call.1']
    #allocation4 [shape = 's32[2]{0}', space=sflag, size = 0x8, scoped, tag = 'scoped memory for tpu_custom_call.1']
    #allocation5 [shape = 'u8[32768]{0}', space=vmem, size = 0x8000, scoped, tag = 'input window, operand 1']
    #allocation6 [shape = 's32[2]{0}', space=sflag, size = 0x8, scoped, tag = 'scoped memory for tpu_custom_call.1']
    #allocation7 [shape = 'u8[131072]{0}', space=vmem, size = 0x20000, scoped, tag = 'output window, operand 0']
    %7 = vsyncpa [#allocation3], 0
    %s8 = scalar_lea.sflag [#allocation3], 1
    %9 = vsyncpa %s8, 0
    %10 = vsyncpa [#allocation6], 0
    %s11 = scalar_lea.sflag [#allocation6], 1
    %12 = vsyncpa %s11, 0
    %13 = vsyncpa [#allocation4], 0
    %s14 = scalar_lea.sflag [#allocation4], 1
    %15 = vsyncpa %s14, 0
    loop: start=0, step=1, limit=4
    $region2: #{tpu_custom_call.1} parent=1 // loop_pre_header
      _
    $region3: #{tpu_custom_call.1} parent=1 // loop_header
      %s17 = sphi 0, %s21
      %p18 = scmp.ge.s32.totalorder %s17, 4
      %s24 = sphi 0, %s36
      %s25 = sphi 0, %s32
      %s26 = sphi 0, %s24
      %s27 = sphi 0, %s25
      %s28 = sphi 0, %s26
      %s29 = sphi 0, %s27
      %s41 = sphi 0, %s43
      %s44 = sphi 0, %s41
      %s45 = sphi 0, %s44
      %s61 = sphi 0, %s45
      %s67 = sphi 0, %s69
      %s70 = sphi 0, %s67
      %s71 = sphi 0, %s70
      %s87 = sphi 0, %s71
      %s95 = sphi 0, %s97
      %s98 = sphi 0, %s95
      %s99 = sphi 0, %s98
      %s115 = sphi 0, %s99
    $region4: #{tpu_custom_call.1} parent=1 // loop_header_branch
      %20 = sbr.rel (%p18) target = $region8
    $region5: #{tpu_custom_call.1} parent=1 // loop_body
      %s22 = ssub.s32 %s17, 1
      %s23 = ssub.s32 %s17, 2
      %s30 = sadd.s32 1, %s25
      %p31 = scmp.ge.s32.totalorder %s30, 1
      %s32 = scalar_select %p31, 0, %s30
      %s33 = sadd.s32 1, %s24
      %s34 = scalar_select %p31, %s33, %s24
      %p35 = scmp.ge.s32.totalorder %s34, 2
      %s36 = scalar_select %p35, 0, %s34
      %s37 = ssub.s32 %s25, %s32
      %s38 = ssub.s32 %s24, %s36
      %s39 = sor.u32 %s37, %s38
      %p40 = scmp.eq.s32.totalorder %s39, 0
      %s42 = sadd.s32 %s41, 1
      %s43 = scalar_select %p40, %s41, %s42
      %p46 = pneg %p40
      %p47 = scmp.eq.s32.totalorder %s17, 1
      %p48 = por %p46, %p47
      %p49 = scmp.ne.s32.totalorder %s41, %s44
      %p50 = scmp.eq.s32.totalorder %s17, 0
      %p51 = por %p49, %p50
      %p52 = scmp.ne.s32.totalorder %s41, %s44
      %p53 = scmp.eq.s32.totalorder %s22, 1
      %p54 = por %p52, %p53
      %p55 = scmp.ne.s32.totalorder %s44, %s45
      %p56 = scmp.eq.s32.totalorder %s22, 0
      %p57 = por %p55, %p56
      %p58 = scmp.ne.s32.totalorder %s44, %s45
      %p59 = scmp.eq.s32.totalorder %s23, 1
      %p60 = por %p58, %p59
      %p62 = scmp.ne.s32.totalorder %s45, %s61
      %p63 = scmp.eq.s32.totalorder %s23, 0
      %p64 = por %p62, %p63
      %s65 = ssub.s32 %s24, %s36
      %p66 = scmp.eq.s32.totalorder %s65, 0
      %s68 = sadd.s32 %s67, 1
      %s69 = scalar_select %p66, %s67, %s68
      %p72 = pneg %p66
      %p73 = scmp.eq.s32.totalorder %s17, 1
      %p74 = por %p72, %p73
      %p75 = scmp.ne.s32.totalorder %s67, %s70
      %p76 = scmp.eq.s32.totalorder %s17, 0
      %p77 = por %p75, %p76
      %p78 = scmp.ne.s32.totalorder %s67, %s70
      %p79 = scmp.eq.s32.totalorder %s22, 1
      %p80 = por %p78, %p79
      %p81 = scmp.ne.s32.totalorder %s70, %s71
      %p82 = scmp.eq.s32.totalorder %s22, 0
      %p83 = por %p81, %p82
      %p84 = scmp.ne.s32.totalorder %s70, %s71
      %p85 = scmp.eq.s32.totalorder %s23, 1
      %p86 = por %p84, %p85
      %p88 = scmp.ne.s32.totalorder %s71, %s87
      %p89 = scmp.eq.s32.totalorder %s23, 0
      %p90 = por %p88, %p89
      %s91 = ssub.s32 %s25, %s32
      %s92 = ssub.s32 %s24, %s36
      %s93 = sor.u32 %s91, %s92
      %p94 = scmp.eq.s32.totalorder %s93, 0
      %s96 = sadd.s32 %s95, 1
      %s97 = scalar_select %p94, %s95, %s96
      %p100 = pneg %p94
      %p101 = scmp.eq.s32.totalorder %s17, 1
      %p102 = por %p100, %p101
      %p103 = scmp.ne.s32.totalorder %s95, %s98
      %p104 = scmp.eq.s32.totalorder %s17, 0
      %p105 = por %p103, %p104
      %p106 = scmp.ne.s32.totalorder %s95, %s98
      %p107 = scmp.eq.s32.totalorder %s22, 1
      %p108 = por %p106, %p107
      %p109 = scmp.ne.s32.totalorder %s98, %s99
      %p110 = scmp.eq.s32.totalorder %s22, 0
      %p111 = por %p109, %p110
      %p112 = scmp.ne.s32.totalorder %s98, %s99
      %p113 = scmp.eq.s32.totalorder %s23, 1
      %p114 = por %p112, %p113
      %p116 = scmp.ne.s32.totalorder %s99, %s115
      %p117 = scmp.eq.s32.totalorder %s23, 0
      %p118 = por %p116, %p117
      %p119 = scmp.le.s32.totalorder 1, %s17
      %p120 = scmp.lt.s32.totalorder %s17, 3
      %p121 = pnand %p119, %p120
      %p122 = pneg %p121
      // Predicated region
      $region9: #{tpu_custom_call.1} parent=5 // pred_check
        _
      $region10: #{tpu_custom_call.1} parent=5 // pred_check_branch
        %124 = sbr.rel (%p121) target = $region12
      $region11: #{tpu_custom_call.1} parent=5 // pred_region
        %s125 = ssub.s32 %s17, 1
      $region12: #{tpu_custom_call.1} parent=5 // pred_fallthru
        _
      %p126 = scmp.lt.s32.totalorder %s17, 2
      // Predicated region
      $region13: #{tpu_custom_call.1} parent=5 // pred_check
        %p127 = pneg %p126
      $region14: #{tpu_custom_call.1} parent=5 // pred_check_branch
        %129 = sbr.rel (%p127) target = $region16
      $region15: #{tpu_custom_call.1} parent=5 // pred_region
        // Predicated region
        $region17: #{tpu_custom_call.1} parent=15 // pred_check
          %p130 = pneg %p51
        $region18: #{tpu_custom_call.1} parent=15 // pred_check_branch
          %132 = sbr.rel (%p130) target = $region20
        $region19: #{tpu_custom_call.1} parent=15 // pred_region
          %s133 = sand.u32 %s41, 1
          %s134 = scalar_lea.sflag [#allocation3], %s133
          %s135 = sand.u32 %s41, 1
          %s136 = smul.addr %s135, 128
          %s137 = scalar_lea.vmem [#allocation2], %s136
          %s138 = smul.u32 32, %s24
          %s140 = ssub.s32 2048, 2048
          %141 = vsyncadd %s134, %s140
          %s142 = smul.addr %s25, 64
          %s143 = sadd.s32 %s138, %s142
          %s144 = smul.addr %s143, 64
          %s145 = scalar_lea.hbm %s0, %s144
          %s147 = sshll.u32 %s137, 4
          %s148 = int_to_ptr.vmem [resolvable:$true] %s147
          %150 = dma.hbm_to_vmem [thread:$0]  %s145, 2048, %s148, %s134
        $region20: #{tpu_custom_call.1} parent=15 // pred_fallthru
          _
        // Predicated region
        $region21: #{tpu_custom_call.1} parent=15 // pred_check
          %p151 = pneg %p77
        $region22: #{tpu_custom_call.1} parent=15 // pred_check_branch
          %153 = sbr.rel (%p151) target = $region24
        $region23: #{tpu_custom_call.1} parent=15 // pred_region
          %s154 = sand.u32 %s67, 1
          %s155 = scalar_lea.sflag [#allocation6], %s154
          %s156 = sand.u32 %s67, 1
          %s157 = smul.addr %s156, 32
          %s158 = scalar_lea.vmem [#allocation5], %s157
          %s159 = smul.u32 32, %s24
          %s161 = ssub.s32 512, 512
          %162 = vsyncadd %s155, %s161
          %s163 = smul.addr %s159, 16
          %s164 = scalar_lea.hbm %s1, %s163
          %s166 = sshll.u32 %s158, 4
          %s167 = int_to_ptr.vmem [resolvable:$true] %s166
          %169 = dma.hbm_to_vmem [thread:$0]  %s164, 512, %s167, %s155
        $region24: #{tpu_custom_call.1} parent=15 // pred_fallthru
          _
      $region16: #{tpu_custom_call.1} parent=5 // pred_fallthru
        _
      %p170 = scmp.le.s32.totalorder 1, %s17
      %p171 = scmp.lt.s32.totalorder %s17, 3
      %p172 = pnand %p170, %p171
      %p173 = pneg %p172
      // Predicated region
      $region25: #{tpu_custom_call.1} parent=5 // pred_check
        _
      $region26: #{tpu_custom_call.1} parent=5 // pred_check_branch
        %175 = sbr.rel (%p172) target = $region28
      $region27: #{tpu_custom_call.1} parent=5 // pred_region
        %s176 = ssub.s32 %s17, 1
        %s177 = sand.u32 %s44, 1
        %s178 = scalar_lea.sflag [#allocation3], %s177
        %s179 = sand.u32 %s44, 1
        %s180 = smul.addr %s179, 128
        %s181 = scalar_lea.vmem [#allocation2], %s180
        // Predicated region
        $region29: #{tpu_custom_call.1} parent=27 // pred_check
          %p182 = pneg %p57
        $region30: #{tpu_custom_call.1} parent=27 // pred_check_branch
          %184 = sbr.rel (%p182) target = $region32
        $region31: #{tpu_custom_call.1} parent=27 // pred_region
          %185 = dma.done %s178, 2048
        $region32: #{tpu_custom_call.1} parent=27 // pred_fallthru
          _
        %s186 = sand.u32 %s70, 1
        %s187 = scalar_lea.sflag [#allocation6], %s186
        %s188 = sand.u32 %s70, 1
        %s189 = smul.addr %s188, 32
        %s190 = scalar_lea.vmem [#allocation5], %s189
        // Predicated region
        $region33: #{tpu_custom_call.1} parent=27 // pred_check
          %p191 = pneg %p83
        $region34: #{tpu_custom_call.1} parent=27 // pred_check_branch
          %193 = sbr.rel (%p191) target = $region36
        $region35: #{tpu_custom_call.1} parent=27 // pred_region
          %194 = dma.done %s187, 512
        $region36: #{tpu_custom_call.1} parent=27 // pred_fallthru
          _
        %s195 = sand.u32 %s44, 1
        %s196 = scalar_lea.sflag [#allocation3], %s195
        %s197 = sand.u32 %s44, 1
        %s198 = smul.addr %s197, 128
        %s199 = scalar_lea.vmem [#allocation2], %s198
        %p200 = pneg %p57
        %p201 = pneg %p54
        %s202 = sand.u32 %s70, 1
        %s203 = scalar_lea.sflag [#allocation6], %s202
        %s204 = sand.u32 %s70, 1
        %s205 = smul.addr %s204, 32
        %s206 = scalar_lea.vmem [#allocation5], %s205
        %p207 = pneg %p83
        %p208 = pneg %p80
        %p209 = pneg %p111
        %p210 = pneg %p108
        %s211 = sand.u32 %s98, 1
        %s212 = scalar_lea.sflag [#allocation4], %s211
        %s213 = sand.u32 %s98, 1
        %s214 = smul.addr %s213, 128
        %s215 = scalar_lea.vmem [#allocation7], %s214
        %s216 = smul.u32 32, %s26
        %s217 = smul.u32 32, %s26
        %s218 = smul.u32 32, %s26
        %v219 = vld [vmem:[%s181] sm:$0xff]
        %v220 = vld [vmem:[%s181 + $0x8] sm:$0xff]
        %v221 = vld [vmem:[%s181 + $0x10] sm:$0xff]
        %v222 = vld [vmem:[%s181 + $0x18] sm:$0xff]
        %v223 = vld [vmem:[%s181 + $0x20] sm:$0xff]
        %v224 = vld [vmem:[%s181 + $0x28] sm:$0xff]
        %v225 = vld [vmem:[%s181 + $0x30] sm:$0xff]
        %v226 = vld [vmem:[%s181 + $0x38] sm:$0xff]
        %v227 = vld [vmem:[%s181 + $0x40] sm:$0xff]
        %v228 = vld [vmem:[%s181 + $0x48] sm:$0xff]
        %v229 = vld [vmem:[%s181 + $0x50] sm:$0xff]
        %v230 = vld [vmem:[%s181 + $0x58] sm:$0xff]
        %v231 = vld [vmem:[%s181 + $0x60] sm:$0xff]
        %v232 = vld [vmem:[%s181 + $0x68] sm:$0xff]
        %v233 = vld [vmem:[%s181 + $0x70] sm:$0xff]
        %v234 = vld [vmem:[%s181 + $0x78] sm:$0xff]
        %v235 = vld [vmem:[%s190] sm:$0xff]
        %v236 = vld [vmem:[%s190 + $0x8] sm:$0xff]
        %v237 = vld [vmem:[%s190 + $0x10] sm:$0xff]
        %v238 = vld [vmem:[%s190 + $0x18] sm:$0xff]
        %v243 = vlaneseq
        %v244 = vshrl.u32 %v243, 7
        %v245 = vsub.s32 0, %v244
        %v246 = vrot.slane %v235, %v245
        %v247 = vlaneseq
        %v248 = vshrl.u32 %v247, 7
        %v249 = vsub.s32 1, %v248
        %v250 = vrot.slane %v235, %v249
        %v251 = vlaneseq
        %v252 = vshrl.u32 %v251, 7
        %v253 = vsub.s32 2, %v252
        %v254 = vrot.slane %v235, %v253
        %v255 = vlaneseq
        %v256 = vshrl.u32 %v255, 7
        %v257 = vsub.s32 3, %v256
        %v258 = vrot.slane %v235, %v257
        %v259 = vlaneseq
        %v260 = vshrl.u32 %v259, 7
        %v261 = vsub.s32 4, %v260
        %v262 = vrot.slane %v235, %v261
        %v263 = vlaneseq
        %v264 = vshrl.u32 %v263, 7
        %v265 = vsub.s32 5, %v264
        %v266 = vrot.slane %v235, %v265
        %v267 = vlaneseq
        %v268 = vshrl.u32 %v267, 7
        %v269 = vsub.s32 6, %v268
        %v270 = vrot.slane %v235, %v269
        %v271 = vlaneseq
        %v272 = vshrl.u32 %v271, 7
        %v273 = vsub.s32 7, %v272
        %v274 = vrot.slane %v235, %v273
        %v275 = vlaneseq
        %v276 = vshrl.u32 %v275, 7
        %v277 = vsub.s32 0, %v276
        %v278 = vrot.slane %v236, %v277
        %v279 = vlaneseq
        %v280 = vshrl.u32 %v279, 7
        %v281 = vsub.s32 1, %v280
        %v282 = vrot.slane %v236, %v281
        %v283 = vlaneseq
        %v284 = vshrl.u32 %v283, 7
        %v285 = vsub.s32 2, %v284
        %v286 = vrot.slane %v236, %v285
        %v287 = vlaneseq
        %v288 = vshrl.u32 %v287, 7
        %v289 = vsub.s32 3, %v288
        %v290 = vrot.slane %v236, %v289
        %v291 = vlaneseq
        %v292 = vshrl.u32 %v291, 7
        %v293 = vsub.s32 4, %v292
        %v294 = vrot.slane %v236, %v293
        %v295 = vlaneseq
        %v296 = vshrl.u32 %v295, 7
        %v297 = vsub.s32 5, %v296
        %v298 = vrot.slane %v236, %v297
        %v299 = vlaneseq
        %v300 = vshrl.u32 %v299, 7
        %v301 = vsub.s32 6, %v300
        %v302 = vrot.slane %v236, %v301
        %v303 = vlaneseq
        %v304 = vshrl.u32 %v303, 7
        %v305 = vsub.s32 7, %v304
        %v306 = vrot.slane %v236, %v305
        %v307 = vlaneseq
        %v308 = vshrl.u32 %v307, 7
        %v309 = vsub.s32 0, %v308
        %v310 = vrot.slane %v237, %v309
        %v311 = vlaneseq
        %v312 = vshrl.u32 %v311, 7
        %v313 = vsub.s32 1, %v312
        %v314 = vrot.slane %v237, %v313
        %v315 = vlaneseq
        %v316 = vshrl.u32 %v315, 7
        %v317 = vsub.s32 2, %v316
        %v318 = vrot.slane %v237, %v317
        %v319 = vlaneseq
        %v320 = vshrl.u32 %v319, 7
        %v321 = vsub.s32 3, %v320
        %v322 = vrot.slane %v237, %v321
        %v323 = vlaneseq
        %v324 = vshrl.u32 %v323, 7
        %v325 = vsub.s32 4, %v324
        %v326 = vrot.slane %v237, %v325
        %v327 = vlaneseq
        %v328 = vshrl.u32 %v327, 7
        %v329 = vsub.s32 5, %v328
        %v330 = vrot.slane %v237, %v329
        %v331 = vlaneseq
        %v332 = vshrl.u32 %v331, 7
        %v333 = vsub.s32 6, %v332
        %v334 = vrot.slane %v237, %v333
        %v335 = vlaneseq
        %v336 = vshrl.u32 %v335, 7
        %v337 = vsub.s32 7, %v336
        %v338 = vrot.slane %v237, %v337
        %v339 = vlaneseq
        %v340 = vshrl.u32 %v339, 7
        %v341 = vsub.s32 0, %v340
        %v342 = vrot.slane %v238, %v341
        %v343 = vlaneseq
        %v344 = vshrl.u32 %v343, 7
        %v345 = vsub.s32 1, %v344
        %v346 = vrot.slane %v238, %v345
        %v347 = vlaneseq
        %v348 = vshrl.u32 %v347, 7
        %v349 = vsub.s32 2, %v348
        %v350 = vrot.slane %v238, %v349
        %v351 = vlaneseq
        %v352 = vshrl.u32 %v351, 7
        %v353 = vsub.s32 3, %v352
        %v354 = vrot.slane %v238, %v353
        %v355 = vlaneseq
        %v356 = vshrl.u32 %v355, 7
        %v357 = vsub.s32 4, %v356
        %v358 = vrot.slane %v238, %v357
        %v359 = vlaneseq
        %v360 = vshrl.u32 %v359, 7
        %v361 = vsub.s32 5, %v360
        %v362 = vrot.slane %v238, %v361
        %v363 = vlaneseq
        %v364 = vshrl.u32 %v363, 7
        %v365 = vsub.s32 6, %v364
        %v366 = vrot.slane %v238, %v365
        %v367 = vlaneseq
        %v368 = vshrl.u32 %v367, 7
        %v369 = vsub.s32 7, %v368
        %v370 = vrot.slane %v238, %v369
        %v371 = vcombine.low %v246, %v250
        %v372 = vcombine.low %v254, %v258
        %v373 = vcombine.low %v262, %v266
        %v374 = vcombine.low %v270, %v274
        %v375 = vcombine.low %v278, %v282
        %v376 = vcombine.low %v286, %v290
        %v377 = vcombine.low %v294, %v298
        %v378 = vcombine.low %v302, %v306
        %v379 = vcombine.low %v310, %v314
        %v380 = vcombine.low %v318, %v322
        %v381 = vcombine.low %v326, %v330
        %v382 = vcombine.low %v334, %v338
        %v383 = vcombine.low %v342, %v346
        %v384 = vcombine.low %v350, %v354
        %v385 = vcombine.low %v358, %v362
        %v386 = vcombine.low %v366, %v370
        %v403 = vadd.f32 %v219, %v371
        %v404 = vadd.f32 %v220, %v372
        %v405 = vadd.f32 %v221, %v373
        %v406 = vadd.f32 %v222, %v374
        %v407 = vadd.f32 %v223, %v375
        %v408 = vadd.f32 %v224, %v376
        %v409 = vadd.f32 %v225, %v377
        %v410 = vadd.f32 %v226, %v378
        %v411 = vadd.f32 %v227, %v379
        %v412 = vadd.f32 %v228, %v380
        %v413 = vadd.f32 %v229, %v381
        %v414 = vadd.f32 %v230, %v382
        %v415 = vadd.f32 %v231, %v383
        %v416 = vadd.f32 %v232, %v384
        %v417 = vadd.f32 %v233, %v385
        %v418 = vadd.f32 %v234, %v386
        %419 = vst [vmem:[%s215] sm:$0xff] %v403
        %420 = vst [vmem:[%s215 + $0x8] sm:$0xff] %v404
        %421 = vst [vmem:[%s215 + $0x10] sm:$0xff] %v405
        %422 = vst [vmem:[%s215 + $0x18] sm:$0xff] %v406
        %423 = vst [vmem:[%s215 + $0x20] sm:$0xff] %v407
        %424 = vst [vmem:[%s215 + $0x28] sm:$0xff] %v408
        %425 = vst [vmem:[%s215 + $0x30] sm:$0xff] %v409
        %426 = vst [vmem:[%s215 + $0x38] sm:$0xff] %v410
        %427 = vst [vmem:[%s215 + $0x40] sm:$0xff] %v411
        %428 = vst [vmem:[%s215 + $0x48] sm:$0xff] %v412
        %429 = vst [vmem:[%s215 + $0x50] sm:$0xff] %v413
        %430 = vst [vmem:[%s215 + $0x58] sm:$0xff] %v414
        %431 = vst [vmem:[%s215 + $0x60] sm:$0xff] %v415
        %432 = vst [vmem:[%s215 + $0x68] sm:$0xff] %v416
        %433 = vst [vmem:[%s215 + $0x70] sm:$0xff] %v417
        %434 = vst [vmem:[%s215 + $0x78] sm:$0xff] %v418
        %s435 = sand.u32 %s98, 1
        %s436 = scalar_lea.sflag [#allocation4], %s435
        %s437 = sand.u32 %s98, 1
        %s438 = smul.addr %s437, 128
        %s439 = scalar_lea.vmem [#allocation7], %s438
        // Predicated region
        $region37: #{tpu_custom_call.1} parent=27 // pred_check
          %p440 = pneg %p108
        $region38: #{tpu_custom_call.1} parent=27 // pred_check_branch
          %442 = sbr.rel (%p440) target = $region40
        $region39: #{tpu_custom_call.1} parent=27 // pred_region
          %s443 = smul.u32 32, %s26
          %s445 = ssub.s32 2048, 2048
          %446 = vsyncadd %s436, %s445
          %s447 = smul.addr %s27, 64
          %s448 = sadd.s32 %s443, %s447
          %s449 = smul.addr %s448, 64
          %s450 = scalar_lea.hbm %s2, %s449
          %s452 = sshll.u32 %s439, 4
          %s453 = int_to_ptr.vmem [resolvable:$true] %s452
          %455 = dma.vmem_to_hbm [thread:$0]  %s453, 2048, %s450, %s436
        $region40: #{tpu_custom_call.1} parent=27 // pred_fallthru
          _
      $region28: #{tpu_custom_call.1} parent=5 // pred_fallthru
        _
      %p456 = scmp.le.s32.totalorder 2, %s17
      // Predicated region
      $region41: #{tpu_custom_call.1} parent=5 // pred_check
        %p457 = pneg %p456
      $region42: #{tpu_custom_call.1} parent=5 // pred_check_branch
        %459 = sbr.rel (%p457) target = $region44
      $region43: #{tpu_custom_call.1} parent=5 // pred_region
        %s460 = ssub.s32 %s17, 2
        // Predicated region
        $region45: #{tpu_custom_call.1} parent=43 // pred_check
          %p461 = pneg %p114
        $region46: #{tpu_custom_call.1} parent=43 // pred_check_branch
          %463 = sbr.rel (%p461) target = $region48
        $region47: #{tpu_custom_call.1} parent=43 // pred_region
          %s464 = sand.u32 %s99, 1
          %s465 = scalar_lea.sflag [#allocation4], %s464
          %s466 = sand.u32 %s99, 1
          %s467 = smul.addr %s466, 128
          %s468 = scalar_lea.vmem [#allocation7], %s467
          %469 = dma.done %s465, 2048
        $region48: #{tpu_custom_call.1} parent=43 // pred_fallthru
          _
      $region44: #{tpu_custom_call.1} parent=5 // pred_fallthru
        _
    $region6: #{tpu_custom_call.1} parent=1 // loop_footer
      %s21 = sadd.s32 1, %s17
    $region7: #{tpu_custom_call.1} parent=1 // loop_footer_branch
      %16 = sbr.rel target = $region3
    $region8: #{tpu_custom_call.1} parent=1 // loop_exit
      _
    %470 = vsyncpa [#allocation3], 1
    %s471 = scalar_lea.sflag [#allocation3], 1
    %472 = vsyncpa %s471, 1
    %473 = vsyncpa [#allocation6], 1
    %s474 = scalar_lea.sflag [#allocation6], 1
    %475 = vsyncpa %s474, 1
    %476 = vsyncpa [#allocation4], 1
    %s477 = scalar_lea.sflag [#allocation4], 1
    %478 = vsyncpa %s477, 1

</llo_original>
